<compile_context>
chip_gen: v5e
topology: v5e:2x2
jax: 0.10.0
libtpu: 0.0.40
codegen_flags: <defaults>
</compile_context>

<pallas_src>
import functools

import jax
import jax.numpy as jnp
from jax.experimental import pallas as pl
from jax.experimental.pallas import tpu as pltpu

_VMEM_LIMIT_BYTES = 32 * 1024 * 1024      # safe on v5e/v6e (128 MiB phys) and v7x (64 MiB phys)
_FUSED_VMEM_BUDGET = 24 * 1024 * 1024     # headroom below the scoped limit for the fused path


# ----------------------------------------------------------------------------
# Fused single-call kernel (graph fully VMEM-resident)
# ----------------------------------------------------------------------------
def pagcn_fused_kernel(adjz_ref, adj_ref, x_ref, m_ref, z_ref,
                       w0_ref, b0_ref, w1_ref, b1_ref, w2_ref, b2_ref, o_ref):
    """Whole 3-layer forward on VMEM-resident data (grid has a single step)."""
    adjz = adjz_ref[...]            # bf16 [N, N]
    adj = adj_ref[...]              # bf16 [N, N]
    m = m_ref[...]                  # f32  [N, F]
    z = z_ref[...]                  # f32  [N, F]

    # ---- layer 0: x0 = relu(((adjZ @ (M*x)) * Z) @ W0T + b0) ----
    mx = (m * x_ref[...]).astype(adjz.dtype)                      # f32 VPU mul, cast for MXU
    h0 = jnp.dot(adjz, mx, preferred_element_type=jnp.float32) * z
    x0 = jnp.dot(h0, w0_ref[...], preferred_element_type=jnp.float32) + b0_ref[...]
    x0 = jnp.maximum(x0, 0.0)

    # ---- layer 1: x1 = relu(((adjZ @ (M*x0)) * Z) @ W1T + b1) ----
    mx0 = (m * x0).astype(adjz.dtype)
    h1 = jnp.dot(adjz, mx0, preferred_element_type=jnp.float32) * z
    x1 = jnp.dot(h1, w1_ref[...], preferred_element_type=jnp.float32) + b1_ref[...]
    x1 = jnp.maximum(x1, 0.0)

    # ---- layer 2: log_softmax(adj @ (x1 @ W2) + b2) ----
    support = jnp.dot(x1, w2_ref[...], preferred_element_type=jnp.float32)
    logits = jnp.dot(adj, support.astype(adj.dtype),
                     preferred_element_type=jnp.float32) + b2_ref[...]
    mrow = jnp.max(logits, axis=1, keepdims=True)
    zc = logits - mrow
    lse = jnp.log(jnp.sum(jnp.exp(zc), axis=1, keepdims=True))
    o_ref[...] = zc - lse


def pagcn_forward_fused(x, adj, adjZ, M, Z, params, *, adj_dtype=jnp.bfloat16):
    N, nfeat = x.shape
    nhid = params["W1"].shape[0]
    nclass = params["W2"].shape[1]

    adjz_c = adjZ.astype(adj_dtype)          # stream adjacency as bf16 (HBM-bound)
    adj_c = adj.astype(adj_dtype)
    w0t = params["W0"].T                     # pre-transpose to [in, out] -> no in-kernel .T
    w1t = params["W1"].T
    w2 = params["W2"]                        # GConv weight already [in, out]
    b0 = params["b0"].reshape(1, nfeat)
    b1 = params["b1"].reshape(1, nhid)
    b2 = params["b2"].reshape(1, nclass)

    def full(shape):
        return pl.BlockSpec(shape, lambda i: (0,) * len(shape))

    return pl.pallas_call(
        pagcn_fused_kernel,
        out_shape=jax.ShapeDtypeStruct((N, nclass), jnp.float32),
        grid_spec=pltpu.PrefetchScalarGridSpec(
            num_scalar_prefetch=0,
            grid=(1,),
            in_specs=[
                full((N, N)),              # adjZ (bf16)
                full((N, N)),              # adj  (bf16)
                full((N, nfeat)),          # x
                full((N, nfeat)),          # M
                full((N, nfeat)),          # Z
                full((nfeat, nfeat)),      # W0T [in, out]
                full((1, nfeat)),          # b0
                full((nfeat, nhid)),       # W1T [in, out]
                full((1, nhid)),           # b1
                full((nhid, nclass)),      # W2  [in, out]
                full((1, nclass)),         # b2
            ],
            out_specs=full((N, nclass)),
        ),
        compiler_params=pltpu.CompilerParams(
            dimension_semantics=("arbitrary",),
            vmem_limit_bytes=_VMEM_LIMIT_BYTES,
        ),
    )(adjz_c, adj_c, x, M, Z, w0t, b0, w1t, b1, w2, b2)


# ----------------------------------------------------------------------------
# General tiled path (row tiles x K-reduction over N) for graphs > VMEM
# ----------------------------------------------------------------------------
def pagconv_tiled_kernel(adjz_ref, mx_ref, z_ref, w_ref, b_ref, ep_ref,
                         o_ref, acc_ref, *, epilogue):
    """Row tile of: relu(((adjZ @ MX) * Z) @ W + b) followed by a fused epilogue.

    epilogue == "mul":    out = relu(...) * ep   (ep = M row tile -> next layer's MX operand)
    epilogue == "matmul": out = relu(...) @ ep   (ep = W2         -> next layer's support)
    K (reduction over N) is the last, innermost grid axis.
    """
    k = pl.program_id(1)

    @pl.when(k == 0)
    def _():
        acc_ref[...] = jnp.zeros_like(acc_ref)

    acc_ref[...] += jnp.dot(adjz_ref[...], mx_ref[...],
                            preferred_element_type=jnp.float32)

    @pl.when(k == pl.num_programs(1) - 1)
    def _():
        h = acc_ref[...] * z_ref[...]                                      # f32 elementwise
        y = jnp.dot(h, w_ref[...], preferred_element_type=jnp.float32) + b_ref[...]
        y = jnp.maximum(y, 0.0)
        if epilogue == "mul":
            y = y * ep_ref[...]
        else:  # "matmul"
            y = jnp.dot(y, ep_ref[...], preferred_element_type=jnp.float32)
        o_ref[...] = y.astype(o_ref.dtype)


def gconv_ls_tiled_kernel(adj_ref, s_ref, b_ref, o_ref, acc_ref):
    """Row tile of: log_softmax(adj @ support + b, axis=1) with K-reduction over N."""
    k = pl.program_id(1)

    @pl.when(k == 0)
    def _():
        acc_ref[...] = jnp.zeros_like(acc_ref)

    acc_ref[...] += jnp.dot(adj_ref[...], s_ref[...],
                            preferred_element_type=jnp.float32)

    @pl.when(k == pl.num_programs(1) - 1)
    def _():
        logits = acc_ref[...] + b_ref[...]
        m = jnp.max(logits, axis=1, keepdims=True)
        zc = logits - m
        lse = jnp.log(jnp.sum(jnp.exp(zc), axis=1, keepdims=True))
        o_ref[...] = zc - lse


def _pagconv_tiled(adjz_c, mx, Z, Wt, b, ep, *, epilogue, out_dtype, t):
    Np, fin = mx.shape
    fout = Wt.shape[1]
    out_cols = fout if epilogue == "mul" else ep.shape[1]

    if epilogue == "mul":
        ep_spec = pl.BlockSpec((t, fout), lambda i, k: (i, 0))       # M row tile
    else:
        ep_spec = pl.BlockSpec(ep.shape, lambda i, k: (0, 0))        # full W2

    return pl.pallas_call(
        functools.partial(pagconv_tiled_kernel, epilogue=epilogue),
        out_shape=jax.ShapeDtypeStruct((Np, out_cols), out_dtype),
        grid_spec=pltpu.PrefetchScalarGridSpec(
            num_scalar_prefetch=0,
            grid=(Np // t, Np // t),                                  # (row tiles, K tiles)
            in_specs=[
                pl.BlockSpec((t, t), lambda i, k: (i, k)),            # adjZ tile (bf16)
                pl.BlockSpec((t, fin), lambda i, k: (k, 0)),          # MX K-slice (bf16)
                pl.BlockSpec((t, fin), lambda i, k: (i, 0)),          # Z row tile
                pl.BlockSpec((fin, fout), lambda i, k: (0, 0)),       # W [in, out]
                pl.BlockSpec((1, fout), lambda i, k: (0, 0)),         # bias
                ep_spec,
            ],
            out_specs=pl.BlockSpec((t, out_cols), lambda i, k: (i, 0)),
            scratch_shapes=[pltpu.VMEM((t, fin), jnp.float32)],
        ),
        compiler_params=pltpu.CompilerParams(
            dimension_semantics=("parallel", "arbitrary"),
            vmem_limit_bytes=_VMEM_LIMIT_BYTES,
        ),
    )(adjz_c, mx, Z, Wt, b, ep)


def _gconv_logsoftmax_tiled(adj_c, support, b, *, t):
    Np, nclass = support.shape
    return pl.pallas_call(
        gconv_ls_tiled_kernel,
        out_shape=jax.ShapeDtypeStruct((Np, nclass), jnp.float32),
        grid_spec=pltpu.PrefetchScalarGridSpec(
            num_scalar_prefetch=0,
            grid=(Np // t, Np // t),
            in_specs=[
                pl.BlockSpec((t, t), lambda i, k: (i, k)),            # adj tile (bf16)
                pl.BlockSpec((t, nclass), lambda i, k: (k, 0)),       # support K-slice (bf16)
                pl.BlockSpec((1, nclass), lambda i, k: (0, 0)),       # bias
            ],
            out_specs=pl.BlockSpec((t, nclass), lambda i, k: (i, 0)),
            scratch_shapes=[pltpu.VMEM((t, nclass), jnp.float32)],
        ),
        compiler_params=pltpu.CompilerParams(
            dimension_semantics=("parallel", "arbitrary"),
            vmem_limit_bytes=_VMEM_LIMIT_BYTES,
        ),
    )(adj_c, support, b)


def _pad_rows(a, Np):
    n = a.shape[0]
    if n == Np:
        return a
    return jnp.pad(a, ((0, Np - n),) + ((0, 0),) * (a.ndim - 1))


def _pad_square(a, Np):
    n = a.shape[0]
    if n == Np:
        return a
    return jnp.pad(a, ((0, Np - n), (0, Np - n)))


def pagcn_forward_tiled(x, adj, adjZ, M, Z, params, *, t=128, adj_dtype=jnp.bfloat16):
    N, nfeat = x.shape
    nclass = params["W2"].shape[1]
    Np = t * pl.cdiv(N, t)                     # pad so no rows are silently dropped

    adjz_p = _pad_square(adjZ, Np).astype(adj_dtype)
    adj_p = _pad_square(adj, Np).astype(adj_dtype)
    x_p = _pad_rows(x, Np)
    M_p = _pad_rows(M, Np)
    Z_p = _pad_rows(Z, Np)

    w0t = params["W0"].T
    w1t = params["W1"].T
    w2 = params["W2"]
    b0 = params["b0"].reshape(1, -1)
    b1 = params["b1"].reshape(1, -1)
    b2 = params["b2"].reshape(1, -1)

    # Layer 0: output is already M * relu(fc0(...)) in bf16 (the MX operand of layer 1).
    mx0 = (M_p * x_p).astype(adj_dtype)        # one-time precompute of the first-layer MX
    mx1 = _pagconv_tiled(adjz_p, mx0, Z_p, w0t, b0, M_p,
                         epilogue="mul", out_dtype=adj_dtype, t=t)
    # Layer 1: output is relu(fc1(...)) @ W2 in bf16 (the support operand of layer 2).
    support = _pagconv_tiled(adjz_p, mx1, Z_p, w1t, b1, w2,
                             epilogue="matmul", out_dtype=adj_dtype, t=t)
    # Layer 2: log_softmax(adj @ support + b2).
    out = _gconv_logsoftmax_tiled(adj_p, support, b2, t=t)
    return out[:N]


# ----------------------------------------------------------------------------
# Dispatch: fused when the whole graph fits comfortably in VMEM, else tiled.
# ----------------------------------------------------------------------------
def pagcn_forward(x, adj, adjZ, M, Z, params, *, adj_dtype=jnp.bfloat16):
    N, nfeat = x.shape
    nhid = params["W1"].shape[0]
    nclass = params["W2"].shape[1]
    adj_bytes = 2 * N * N * jnp.dtype(adj_dtype).itemsize
    feat_bytes = 3 * N * nfeat * 4
    temp_bytes = 6 * N * max(nfeat, nhid, nclass) * 4    # in-kernel f32 temporaries
    out_bytes = N * nclass * 4
    needed = adj_bytes + feat_bytes + temp_bytes + out_bytes
    if 2 * needed <= _FUSED_VMEM_BUDGET:
        return pagcn_forward_fused(x, adj, adjZ, M, Z, params, adj_dtype=adj_dtype)
    return pagcn_forward_tiled(x, adj, adjZ, M, Z, params, adj_dtype=adj_dtype)


# ----------------------------------------------------------------------------
# Reference (pure JAX, f32) for sanity check
# ----------------------------------------------------------------------------
def pagcn_reference(x, adj, adjZ, M, Z, params):
    def pag(x_, W, b):
        H = (adjZ @ (M * x_)) * Z
        return jnp.maximum(H @ W.T + b, 0.0)

    x0 = pag(x, params["W0"], params["b0"])
    x1 = pag(x0, params["W1"], params["b1"])
    logits = adj @ (x1 @ params["W2"]) + params["b2"]
    return jax.nn.log_softmax(logits, axis=1)


# ----------------------------------------------------------------------------
# Parameter / input construction (deterministic)
# ----------------------------------------------------------------------------
def xavier_uniform(key, shape, gain=1.414):
    fan_out, fan_in = shape
    limit = gain * jnp.sqrt(6.0 / (fan_in + fan_out))
    return jax.random.uniform(key, shape, jnp.float32, -limit, limit)


if __name__ == "__main__":
    N, nfeat, nhid, nclass = 128, 32, 16, 8

    key = jax.random.PRNGKey(0)
    keys = jax.random.split(key, 8)

    # node features
    x = jax.random.normal(keys[0], (N, nfeat), jnp.float32)

    # dense symmetric normalized adjacency (with self-loops)
    a_raw = jax.random.uniform(keys[1], (N, N), jnp.float32)
    a_bin = (a_raw + a_raw.T > 1.9).astype(jnp.float32) + jnp.eye(N, dtype=jnp.float32)
    deg = jnp.sum(a_bin, axis=1, keepdims=True)
    adj = a_bin / deg
    adjZ = adj  # PaGCN uses a (possibly different) adjZ; same construction here

    # per-node/per-feature masks M and Z (the "AM" factor)
    M = jax.random.uniform(keys[2], (N, nfeat), jnp.float32)
    Z = jax.random.uniform(keys[3], (N, nfeat), jnp.float32)

    params = {
        "W0": xavier_uniform(keys[4], (nfeat, nfeat)),      # gc0.fc.weight [out, in]
        "b0": jnp.zeros((nfeat,), jnp.float32),
        "W1": xavier_uniform(keys[5], (nhid, nfeat)),        # gc1.fc.weight [out, in]
        "b1": jnp.zeros((nhid,), jnp.float32),
        "W2": xavier_uniform(keys[6], (nclass, nhid)).T,     # GConv weight [in, out]
        "b2": jnp.zeros((nclass,), jnp.float32),
    }

    ref = jax.block_until_ready(pagcn_reference(x, adj, adjZ, M, Z, params))

    # Fused path (selected automatically at this size).
    out_fused = jax.block_until_ready(pagcn_forward(x, adj, adjZ, M, Z, params))
    assert out_fused.shape == (N, nclass)
    # bf16 adjacency streaming (f32 accumulation) -> loosened tolerance vs f32 reference.
    assert jnp.allclose(out_fused, ref, atol=3e-2, rtol=3e-2), (
        "fused mismatch, max|diff|=" + str(float(jnp.max(jnp.abs(out_fused - ref)))))

    # General tiled path (exercised explicitly so the large-graph code is validated too).
    out_tiled = jax.block_until_ready(pagcn_forward_tiled(x, adj, adjZ, M, Z, params, t=128))
    assert out_tiled.shape == (N, nclass)
    assert jnp.allclose(out_tiled, ref, atol=3e-2, rtol=3e-2), (
        "tiled mismatch, max|diff|=" + str(float(jnp.max(jnp.abs(out_tiled - ref)))))

    print("KERNEL_OK")
</pallas_src>

<mosaic_0001>
module attributes {stable_mosaic.version = 11 : i64} {
  func.func @pagcn_fused_kernel(%arg0: i32, %arg1: memref<128x128xbf16, #tpu.memory_space<vmem>>, %arg2: memref<128x128xbf16, #tpu.memory_space<vmem>>, %arg3: memref<128x32xf32, #tpu.memory_space<vmem>>, %arg4: memref<128x32xf32, #tpu.memory_space<vmem>>, %arg5: memref<128x32xf32, #tpu.memory_space<vmem>>, %arg6: memref<32x32xf32, #tpu.memory_space<vmem>>, %arg7: memref<1x32xf32, #tpu.memory_space<vmem>>, %arg8: memref<32x16xf32, #tpu.memory_space<vmem>>, %arg9: memref<1x16xf32, #tpu.memory_space<vmem>>, %arg10: memref<16x8xf32, #tpu.memory_space<vmem>>, %arg11: memref<1x8xf32, #tpu.memory_space<vmem>>, %arg12: memref<128x8xf32, #tpu.memory_space<vmem>>) attributes {dimension_semantics = [#tpu.dimension_semantics<arbitrary>], iteration_bounds = array<i64: 1>, scalar_prefetch = 0 : i64, scratch_operands = 0 : i64, tpu.core_type = #tpu.core_type<tc>, window_params = [{pipeline_mode = #tpu.pipeline_mode<synchronous>, transform_indices = @transform_0, window_bounds = array<i64: 128, 128>}, {pipeline_mode = #tpu.pipeline_mode<synchronous>, transform_indices = @transform_1, window_bounds = array<i64: 128, 128>}, {pipeline_mode = #tpu.pipeline_mode<synchronous>, transform_indices = @transform_2, window_bounds = array<i64: 128, 32>}, {pipeline_mode = #tpu.pipeline_mode<synchronous>, transform_indices = @transform_3, window_bounds = array<i64: 128, 32>}, {pipeline_mode = #tpu.pipeline_mode<synchronous>, transform_indices = @transform_4, window_bounds = array<i64: 128, 32>}, {pipeline_mode = #tpu.pipeline_mode<synchronous>, transform_indices = @transform_5, window_bounds = array<i64: 32, 32>}, {pipeline_mode = #tpu.pipeline_mode<synchronous>, transform_indices = @transform_6, window_bounds = array<i64: 1, 32>}, {pipeline_mode = #tpu.pipeline_mode<synchronous>, transform_indices = @transform_7, window_bounds = array<i64: 32, 16>}, {pipeline_mode = #tpu.pipeline_mode<synchronous>, transform_indices = @transform_8, window_bounds = array<i64: 1, 16>}, {pipeline_mode = #tpu.pipeline_mode<synchronous>, transform_indices = @transform_9, window_bounds = array<i64: 16, 8>}, {pipeline_mode = #tpu.pipeline_mode<synchronous>, transform_indices = @transform_10, window_bounds = array<i64: 1, 8>}, {pipeline_mode = #tpu.pipeline_mode<synchronous>, transform_indices = @transform_11, window_bounds = array<i64: 128, 8>}]} {
    %c0 = arith.constant 0 : index
    %c0_0 = arith.constant 0 : index
    %0 = vector.load %arg1[%c0, %c0_0] : memref<128x128xbf16, #tpu.memory_space<vmem>>, vector<128x128xbf16>
    %c0_1 = arith.constant 0 : index
    %c0_2 = arith.constant 0 : index
    %1 = vector.load %arg2[%c0_1, %c0_2] : memref<128x128xbf16, #tpu.memory_space<vmem>>, vector<128x128xbf16>
    %c0_3 = arith.constant 0 : index
    %c0_4 = arith.constant 0 : index
    %2 = vector.load %arg4[%c0_3, %c0_4] : memref<128x32xf32, #tpu.memory_space<vmem>>, vector<128x32xf32>
    %c0_5 = arith.constant 0 : index
    %c0_6 = arith.constant 0 : index
    %3 = vector.load %arg5[%c0_5, %c0_6] : memref<128x32xf32, #tpu.memory_space<vmem>>, vector<128x32xf32>
    %c0_7 = arith.constant 0 : index
    %c0_8 = arith.constant 0 : index
    %4 = vector.load %arg3[%c0_7, %c0_8] : memref<128x32xf32, #tpu.memory_space<vmem>>, vector<128x32xf32>
    %5 = arith.mulf %2, %4 : vector<128x32xf32>
    %6 = arith.truncf %5 : vector<128x32xf32> to vector<128x32xbf16>
    %cst = arith.constant dense<0.000000e+00> : vector<128x32xf32>
    %7 = tpu.matmul %0, %6, %cst {dimension_numbers = #tpu.dot_dimension_numbers<[1], [0], [0], [1], [0, 0, 1, 1], [], []>} : vector<128x128xbf16>, vector<128x32xbf16>, vector<128x32xf32> -> vector<128x32xf32>
    %8 = arith.mulf %7, %3 : vector<128x32xf32>
    %c0_9 = arith.constant 0 : index
    %c0_10 = arith.constant 0 : index
    %9 = vector.load %arg6[%c0_9, %c0_10] : memref<32x32xf32, #tpu.memory_space<vmem>>, vector<32x32xf32>
    %cst_11 = arith.constant dense<0.000000e+00> : vector<128x32xf32>
    %10 = tpu.matmul %8, %9, %cst_11 {dimension_numbers = #tpu.dot_dimension_numbers<[1], [0], [0], [1], [0, 0, 1, 1], [], []>} : vector<128x32xf32>, vector<32x32xf32>, vector<128x32xf32> -> vector<128x32xf32>
    %c0_12 = arith.constant 0 : index
    %c0_13 = arith.constant 0 : index
    %11 = vector.load %arg7[%c0_12, %c0_13] : memref<1x32xf32, #tpu.memory_space<vmem>>, vector<1x32xf32>
    %12 = vector.broadcast %11 : vector<1x32xf32> to vector<128x32xf32>
    %13 = arith.addf %10, %12 : vector<128x32xf32>
    %cst_14 = arith.constant 0.000000e+00 : f32
    %14 = vector.broadcast %cst_14 : f32 to vector<128x32xf32>
    %15 = arith.maximumf %13, %14 : vector<128x32xf32>
    %16 = arith.mulf %2, %15 : vector<128x32xf32>
    %17 = arith.truncf %16 : vector<128x32xf32> to vector<128x32xbf16>
    %cst_15 = arith.constant dense<0.000000e+00> : vector<128x32xf32>
    %18 = tpu.matmul %0, %17, %cst_15 {dimension_numbers = #tpu.dot_dimension_numbers<[1], [0], [0], [1], [0, 0, 1, 1], [], []>} : vector<128x128xbf16>, vector<128x32xbf16>, vector<128x32xf32> -> vector<128x32xf32>
    %19 = arith.mulf %18, %3 : vector<128x32xf32>
    %c0_16 = arith.constant 0 : index
    %c0_17 = arith.constant 0 : index
    %20 = vector.load %arg8[%c0_16, %c0_17] : memref<32x16xf32, #tpu.memory_space<vmem>>, vector<32x16xf32>
    %cst_18 = arith.constant dense<0.000000e+00> : vector<128x16xf32>
    %21 = tpu.matmul %19, %20, %cst_18 {dimension_numbers = #tpu.dot_dimension_numbers<[1], [0], [0], [1], [0, 0, 1, 1], [], []>} : vector<128x32xf32>, vector<32x16xf32>, vector<128x16xf32> -> vector<128x16xf32>
    %c0_19 = arith.constant 0 : index
    %c0_20 = arith.constant 0 : index
    %22 = vector.load %arg9[%c0_19, %c0_20] : memref<1x16xf32, #tpu.memory_space<vmem>>, vector<1x16xf32>
    %23 = vector.broadcast %22 : vector<1x16xf32> to vector<128x16xf32>
    %24 = arith.addf %21, %23 : vector<128x16xf32>
    %cst_21 = arith.constant 0.000000e+00 : f32
    %25 = vector.broadcast %cst_21 : f32 to vector<128x16xf32>
    %26 = arith.maximumf %24, %25 : vector<128x16xf32>
    %c0_22 = arith.constant 0 : index
    %c0_23 = arith.constant 0 : index
    %27 = vector.load %arg10[%c0_22, %c0_23] : memref<16x8xf32, #tpu.memory_space<vmem>>, vector<16x8xf32>
    %cst_24 = arith.constant dense<0.000000e+00> : vector<128x8xf32>
    %28 = tpu.matmul %26, %27, %cst_24 {dimension_numbers = #tpu.dot_dimension_numbers<[1], [0], [0], [1], [0, 0, 1, 1], [], []>} : vector<128x16xf32>, vector<16x8xf32>, vector<128x8xf32> -> vector<128x8xf32>
    %29 = arith.truncf %28 : vector<128x8xf32> to vector<128x8xbf16>
    %cst_25 = arith.constant dense<0.000000e+00> : vector<128x8xf32>
    %30 = tpu.matmul %1, %29, %cst_25 {dimension_numbers = #tpu.dot_dimension_numbers<[1], [0], [0], [1], [0, 0, 1, 1], [], []>} : vector<128x128xbf16>, vector<128x8xbf16>, vector<128x8xf32> -> vector<128x8xf32>
    %c0_26 = arith.constant 0 : index
    %c0_27 = arith.constant 0 : index
    %31 = vector.load %arg11[%c0_26, %c0_27] : memref<1x8xf32, #tpu.memory_space<vmem>>, vector<1x8xf32>
    %32 = vector.broadcast %31 : vector<1x8xf32> to vector<128x8xf32>
    %33 = arith.addf %30, %32 : vector<128x8xf32>
    %cst_28 = arith.constant dense<0xFF800000> : vector<128xf32>
    %34 = vector.multi_reduction <maximumf>, %33, %cst_28 [1] : vector<128x8xf32> to vector<128xf32>
    %35 = vector.shape_cast %34 : vector<128xf32> to vector<128x1xf32>
    %36 = vector.broadcast %35 : vector<128x1xf32> to vector<128x8xf32>
    %37 = arith.subf %33, %36 : vector<128x8xf32>
    %38 = math.exp %37 : vector<128x8xf32>
    %cst_29 = arith.constant dense<0.000000e+00> : vector<128xf32>
    %39 = vector.multi_reduction <add>, %38, %cst_29 [1] : vector<128x8xf32> to vector<128xf32>
    %40 = vector.shape_cast %39 : vector<128xf32> to vector<128x1xf32>
    %41 = math.log %40 : vector<128x1xf32>
    %42 = vector.broadcast %41 : vector<128x1xf32> to vector<128x8xf32>
    %43 = arith.subf %37, %42 : vector<128x8xf32>
    %c0_30 = arith.constant 0 : index
    %c0_31 = arith.constant 0 : index
    %44 = vector.load %arg12[%c0_30, %c0_31] : memref<128x8xf32, #tpu.memory_space<vmem>>, vector<128x8xf32>
    tpu.vector_store %arg12[%c0_30, %c0_31], %43 {strides = array<i32>} : memref<128x8xf32, #tpu.memory_space<vmem>>, vector<128x8xf32>,
    return
  }
  func.func @transform_0(%arg0: i32) -> (i32, i32) {
    %c0_i32 = arith.constant 0 : i32
    %c0_i32_0 = arith.constant 0 : i32
    %c0_i32_1 = arith.constant 0 : i32
    return %c0_i32, %c0_i32_0 : i32, i32
  }
  func.func @transform_1(%arg0: i32) -> (i32, i32) {
    %c0_i32 = arith.constant 0 : i32
    %c0_i32_0 = arith.constant 0 : i32
    %c0_i32_1 = arith.constant 0 : i32
    return %c0_i32, %c0_i32_0 : i32, i32
  }
  func.func @transform_2(%arg0: i32) -> (i32, i32) {
    %c0_i32 = arith.constant 0 : i32
    %c0_i32_0 = arith.constant 0 : i32
    %c0_i32_1 = arith.constant 0 : i32
    return %c0_i32, %c0_i32_0 : i32, i32
  }
  func.func @transform_3(%arg0: i32) -> (i32, i32) {
    %c0_i32 = arith.constant 0 : i32
    %c0_i32_0 = arith.constant 0 : i32
    %c0_i32_1 = arith.constant 0 : i32
    return %c0_i32, %c0_i32_0 : i32, i32
  }
  func.func @transform_4(%arg0: i32) -> (i32, i32) {
    %c0_i32 = arith.constant 0 : i32
    %c0_i32_0 = arith.constant 0 : i32
    %c0_i32_1 = arith.constant 0 : i32
    return %c0_i32, %c0_i32_0 : i32, i32
  }
  func.func @transform_5(%arg0: i32) -> (i32, i32) {
    %c0_i32 = arith.constant 0 : i32
    %c0_i32_0 = arith.constant 0 : i32
    %c0_i32_1 = arith.constant 0 : i32
    return %c0_i32, %c0_i32_0 : i32, i32
  }
  func.func @transform_6(%arg0: i32) -> (i32, i32) {
    %c0_i32 = arith.constant 0 : i32
    %c0_i32_0 = arith.constant 0 : i32
    %c0_i32_1 = arith.constant 0 : i32
    return %c0_i32, %c0_i32_0 : i32, i32
  }
  func.func @transform_7(%arg0: i32) -> (i32, i32) {
    %c0_i32 = arith.constant 0 : i32
    %c0_i32_0 = arith.constant 0 : i32
    %c0_i32_1 = arith.constant 0 : i32
    return %c0_i32, %c0_i32_0 : i32, i32
  }
  func.func @transform_8(%arg0: i32) -> (i32, i32) {
    %c0_i32 = arith.constant 0 : i32
    %c0_i32_0 = arith.constant 0 : i32
    %c0_i32_1 = arith.constant 0 : i32
    return %c0_i32, %c0_i32_0 : i32, i32
  }
  func.func @transform_9(%arg0: i32) -> (i32, i32) {
    %c0_i32 = arith.constant 0 : i32
    %c0_i32_0 = arith.constant 0 : i32
    %c0_i32_1 = arith.constant 0 : i32
    return %c0_i32, %c0_i32_0 : i32, i32
  }
  func.func @transform_10(%arg0: i32) -> (i32, i32) {
    %c0_i32 = arith.constant 0 : i32
    %c0_i32_0 = arith.constant 0 : i32
    %c0_i32_1 = arith.constant 0 : i32
    return %c0_i32, %c0_i32_0 : i32, i32
  }
  func.func @transform_11(%arg0: i32) -> (i32, i32) {
    %c0_i32 = arith.constant 0 : i32
    %c0_i32_0 = arith.constant 0 : i32
    %c0_i32_1 = arith.constant 0 : i32
    return %c0_i32, %c0_i32_0 : i32, i32
  }
}

</mosaic_0001>

<llo_original>
// kernel: tpu_custom_call.1
$region0: #{tpu_custom_call.1}
  #allocation0 [shape = 'u32[]', space=smem, size = 0x4, offset = 0x4, fixed_abs, tag = 'smem constant byte address 0x4 - core index']
  #allocation1 [shape = 'u32[72,128]{1,0:T(1,128)}', space=vmem, size = 0x9000, scoped, tag = 'internal scratch']
  %s0 = inlined_call_operand.vmem [shape: bf16[128,128], index: 0, kind: input, shape index: {}]
  %s1 = inlined_call_operand.vmem [shape: bf16[128,128], index: 1, kind: input, shape index: {}]
  %s2 = inlined_call_operand.vmem [shape: f32[128,32], index: 2, kind: input, shape index: {}]
  %s3 = inlined_call_operand.vmem [shape: f32[128,32], index: 3, kind: input, shape index: {}]
  %s4 = inlined_call_operand.vmem [shape: f32[128,32], index: 4, kind: input, shape index: {}]
  %s5 = inlined_call_operand.vmem [shape: f32[32,32], index: 5, kind: input, shape index: {}]
  %s6 = inlined_call_operand.vmem [shape: f32[1,32], index: 6, kind: input, shape index: {}]
  %s7 = inlined_call_operand.vmem [shape: f32[32,16], index: 7, kind: input, shape index: {}]
  %s8 = inlined_call_operand.vmem [shape: f32[1,16], index: 8, kind: input, shape index: {}]
  %s9 = inlined_call_operand.vmem [shape: f32[16,8], index: 9, kind: input, shape index: {}]
  %s10 = inlined_call_operand.vmem [shape: f32[1,8], index: 10, kind: input, shape index: {}]
  %s11 = inlined_call_operand.vmem [shape: f32[128,8], index: 11, kind: output, shape index: {}]
  %s12 = sld [smem:[#allocation0]]
  $region54: #{tpu_custom_call.1} parent=0
    _
  %s14 = ssub.s32 1, %s12
  %s15 = scalar_select 0, %s14, %s12
  // Predicated region
  $region2: #{tpu_custom_call.1} parent=0 // pred_check
    _
  $region3: #{tpu_custom_call.1} parent=0 // pred_check_branch
    %17 = sbr.rel (0) target = $region5
  $region4: #{tpu_custom_call.1} parent=0 // pred_region
    _
  $region5: #{tpu_custom_call.1} parent=0 // pred_fallthru
    _
  // Predicated region
  $region6: #{tpu_custom_call.1} parent=0 // pred_check
    _
  $region7: #{tpu_custom_call.1} parent=0 // pred_check_branch
    %19 = sbr.rel (0) target = $region9
  $region8: #{tpu_custom_call.1} parent=0 // pred_region
    _
  $region9: #{tpu_custom_call.1} parent=0 // pred_fallthru
    _
  // Predicated region
  $region10: #{tpu_custom_call.1} parent=0 // pred_check
    _
  $region11: #{tpu_custom_call.1} parent=0 // pred_check_branch
    %21 = sbr.rel (0) target = $region13
  $region12: #{tpu_custom_call.1} parent=0 // pred_region
    _
  $region13: #{tpu_custom_call.1} parent=0 // pred_fallthru
    _
  // Predicated region
  $region14: #{tpu_custom_call.1} parent=0 // pred_check
    _
  $region15: #{tpu_custom_call.1} parent=0 // pred_check_branch
    %23 = sbr.rel (0) target = $region17
  $region16: #{tpu_custom_call.1} parent=0 // pred_region
    _
  $region17: #{tpu_custom_call.1} parent=0 // pred_fallthru
    _
  // Predicated region
  $region18: #{tpu_custom_call.1} parent=0 // pred_check
    _
  $region19: #{tpu_custom_call.1} parent=0 // pred_check_branch
    %25 = sbr.rel (0) target = $region21
  $region20: #{tpu_custom_call.1} parent=0 // pred_region
    _
  $region21: #{tpu_custom_call.1} parent=0 // pred_fallthru
    _
  // Predicated region
  $region22: #{tpu_custom_call.1} parent=0 // pred_check
    _
  $region23: #{tpu_custom_call.1} parent=0 // pred_check_branch
    %27 = sbr.rel (0) target = $region25
  $region24: #{tpu_custom_call.1} parent=0 // pred_region
    _
  $region25: #{tpu_custom_call.1} parent=0 // pred_fallthru
    _
  // Predicated region
  $region26: #{tpu_custom_call.1} parent=0 // pred_check
    _
  $region27: #{tpu_custom_call.1} parent=0 // pred_check_branch
    %29 = sbr.rel (0) target = $region29
  $region28: #{tpu_custom_call.1} parent=0 // pred_region
    _
  $region29: #{tpu_custom_call.1} parent=0 // pred_fallthru
    _
  // Predicated region
  $region30: #{tpu_custom_call.1} parent=0 // pred_check
    _
  $region31: #{tpu_custom_call.1} parent=0 // pred_check_branch
    %31 = sbr.rel (0) target = $region33
  $region32: #{tpu_custom_call.1} parent=0 // pred_region
    _
  $region33: #{tpu_custom_call.1} parent=0 // pred_fallthru
    _
  // Predicated region
  $region34: #{tpu_custom_call.1} parent=0 // pred_check
    _
  $region35: #{tpu_custom_call.1} parent=0 // pred_check_branch
    %33 = sbr.rel (0) target = $region37
  $region36: #{tpu_custom_call.1} parent=0 // pred_region
    _
  $region37: #{tpu_custom_call.1} parent=0 // pred_fallthru
    _
  // Predicated region
  $region38: #{tpu_custom_call.1} parent=0 // pred_check
    _
  $region39: #{tpu_custom_call.1} parent=0 // pred_check_branch
    %35 = sbr.rel (0) target = $region41
  $region40: #{tpu_custom_call.1} parent=0 // pred_region
    _
  $region41: #{tpu_custom_call.1} parent=0 // pred_fallthru
    _
  // Predicated region
  $region42: #{tpu_custom_call.1} parent=0 // pred_check
    _
  $region43: #{tpu_custom_call.1} parent=0 // pred_check_branch
    %37 = sbr.rel (0) target = $region45
  $region44: #{tpu_custom_call.1} parent=0 // pred_region
    _
  $region45: #{tpu_custom_call.1} parent=0 // pred_fallthru
    _
  %v38 = vld [vmem:[%s0] sm:$0xf]
  %v39 = vld [vmem:[%s0 + $0x4] sm:$0xf]
  %v40 = vld [vmem:[%s0 + $0x8] sm:$0xf]
  %v41 = vld [vmem:[%s0 + $0xc] sm:$0xf]
  %v42 = vld [vmem:[%s0 + $0x10] sm:$0xf]
  %v43 = vld [vmem:[%s0 + $0x14] sm:$0xf]
  %v44 = vld [vmem:[%s0 + $0x18] sm:$0xf]
  %v45 = vld [vmem:[%s0 + $0x1c] sm:$0xf]
  %v46 = vld [vmem:[%s0 + $0x20] sm:$0xf]
  %v47 = vld [vmem:[%s0 + $0x24] sm:$0xf]
  %v48 = vld [vmem:[%s0 + $0x28] sm:$0xf]
  %v49 = vld [vmem:[%s0 + $0x2c] sm:$0xf]
  %v50 = vld [vmem:[%s0 + $0x30] sm:$0xf]
  %v51 = vld [vmem:[%s0 + $0x34] sm:$0xf]
  %v52 = vld [vmem:[%s0 + $0x38] sm:$0xf]
  %v53 = vld [vmem:[%s0 + $0x3c] sm:$0xf]
  %v54 = vld [vmem:[%s1] sm:$0xf]
  %v55 = vld [vmem:[%s1 + $0x4] sm:$0xf]
  %v56 = vld [vmem:[%s1 + $0x8] sm:$0xf]
  %v57 = vld [vmem:[%s1 + $0xc] sm:$0xf]
  %v58 = vld [vmem:[%s1 + $0x10] sm:$0xf]
  %v59 = vld [vmem:[%s1 + $0x14] sm:$0xf]
  %v60 = vld [vmem:[%s1 + $0x18] sm:$0xf]
  %v61 = vld [vmem:[%s1 + $0x1c] sm:$0xf]
  %v62 = vld [vmem:[%s1 + $0x20] sm:$0xf]
  %v63 = vld [vmem:[%s1 + $0x24] sm:$0xf]
  %v64 = vld [vmem:[%s1 + $0x28] sm:$0xf]
  %v65 = vld [vmem:[%s1 + $0x2c] sm:$0xf]
  %v66 = vld [vmem:[%s1 + $0x30] sm:$0xf]
  %v67 = vld [vmem:[%s1 + $0x34] sm:$0xf]
  %v68 = vld [vmem:[%s1 + $0x38] sm:$0xf]
  %v69 = vld [vmem:[%s1 + $0x3c] sm:$0xf]
  %v70 = vld [vmem:[%s3] sm:$0xff]
  %v71 = vld [vmem:[%s3 + $0x8] sm:$0xff]
  %v72 = vld [vmem:[%s3 + $0x10] sm:$0xff]
  %v73 = vld [vmem:[%s3 + $0x18] sm:$0xff]
  %v74 = vld [vmem:[%s3 + $0x20] sm:$0xff]
  %v75 = vld [vmem:[%s3 + $0x28] sm:$0xff]
  %v76 = vld [vmem:[%s3 + $0x30] sm:$0xff]
  %v77 = vld [vmem:[%s3 + $0x38] sm:$0xff]
  %v78 = vld [vmem:[%s3 + $0x40] sm:$0xff]
  %v79 = vld [vmem:[%s3 + $0x48] sm:$0xff]
  %v80 = vld [vmem:[%s3 + $0x50] sm:$0xff]
  %v81 = vld [vmem:[%s3 + $0x58] sm:$0xff]
  %v82 = vld [vmem:[%s3 + $0x60] sm:$0xff]
  %v83 = vld [vmem:[%s3 + $0x68] sm:$0xff]
  %v84 = vld [vmem:[%s3 + $0x70] sm:$0xff]
  %v85 = vld [vmem:[%s3 + $0x78] sm:$0xff]
  %v86 = vld [vmem:[%s4] sm:$0xff]
  %v87 = vld [vmem:[%s4 + $0x8] sm:$0xff]
  %v88 = vld [vmem:[%s4 + $0x10] sm:$0xff]
  %v89 = vld [vmem:[%s4 + $0x18] sm:$0xff]
  %v90 = vld [vmem:[%s4 + $0x20] sm:$0xff]
  %v91 = vld [vmem:[%s4 + $0x28] sm:$0xff]
  %v92 = vld [vmem:[%s4 + $0x30] sm:$0xff]
  %v93 = vld [vmem:[%s4 + $0x38] sm:$0xff]
  %v94 = vld [vmem:[%s4 + $0x40] sm:$0xff]
  %v95 = vld [vmem:[%s4 + $0x48] sm:$0xff]
  %v96 = vld [vmem:[%s4 + $0x50] sm:$0xff]
  %v97 = vld [vmem:[%s4 + $0x58] sm:$0xff]
  %v98 = vld [vmem:[%s4 + $0x60] sm:$0xff]
  %v99 = vld [vmem:[%s4 + $0x68] sm:$0xff]
  %v100 = vld [vmem:[%s4 + $0x70] sm:$0xff]
  %v101 = vld [vmem:[%s4 + $0x78] sm:$0xff]
  %v102 = vld [vmem:[%s2] sm:$0xff]
  %v103 = vld [vmem:[%s2 + $0x8] sm:$0xff]
  %v104 = vld [vmem:[%s2 + $0x10] sm:$0xff]
  %v105 = vld [vmem:[%s2 + $0x18] sm:$0xff]
  %v106 = vld [vmem:[%s2 + $0x20] sm:$0xff]
  %v107 = vld [vmem:[%s2 + $0x28] sm:$0xff]
  %v108 = vld [vmem:[%s2 + $0x30] sm:$0xff]
  %v109 = vld [vmem:[%s2 + $0x38] sm:$0xff]
  %v110 = vld [vmem:[%s2 + $0x40] sm:$0xff]
  %v111 = vld [vmem:[%s2 + $0x48] sm:$0xff]
  %v112 = vld [vmem:[%s2 + $0x50] sm:$0xff]
  %v113 = vld [vmem:[%s2 + $0x58] sm:$0xff]
  %v114 = vld [vmem:[%s2 + $0x60] sm:$0xff]
  %v115 = vld [vmem:[%s2 + $0x68] sm:$0xff]
  %v116 = vld [vmem:[%s2 + $0x70] sm:$0xff]
  %v117 = vld [vmem:[%s2 + $0x78] sm:$0xff]
  %v118 = vmul.f32 %v70, %v102
  %v119 = vmul.f32 %v71, %v103
  %v120 = vmul.f32 %v72, %v104
  %v121 = vmul.f32 %v73, %v105
  %v122 = vmul.f32 %v74, %v106
  %v123 = vmul.f32 %v75, %v107
  %v124 = vmul.f32 %v76, %v108
  %v125 = vmul.f32 %v77, %v109
  %v126 = vmul.f32 %v78, %v110
  %v127 = vmul.f32 %v79, %v111
  %v128 = vmul.f32 %v80, %v112
  %v129 = vmul.f32 %v81, %v113
  %v130 = vmul.f32 %v82, %v114
  %v131 = vmul.f32 %v83, %v115
  %v132 = vmul.f32 %v84, %v116
  %v133 = vmul.f32 %v85, %v117
  %v134 = vpack.c.bf16 %v119, %v118
  %v135 = vpack.c.bf16 %v121, %v120
  %v136 = vpack.c.bf16 %v123, %v122
  %v137 = vpack.c.bf16 %v125, %v124
  %v138 = vpack.c.bf16 %v127, %v126
  %v139 = vpack.c.bf16 %v129, %v128
  %v140 = vpack.c.bf16 %v131, %v130
  %v141 = vpack.c.bf16 %v133, %v132
  %v158 = vunpack.c.l.b16 %v38
  %v159 = vunpack.c.l.b16 %v39
  %v160 = vunpack.c.l.b16 %v40
  %v161 = vunpack.c.l.b16 %v41
  %v162 = vunpack.c.l.b16 %v42
  %v163 = vunpack.c.l.b16 %v43
  %v164 = vunpack.c.l.b16 %v44
  %v165 = vunpack.c.l.b16 %v45
  %v166 = vunpack.c.l.b16 %v46
  %v167 = vunpack.c.l.b16 %v47
  %v168 = vunpack.c.l.b16 %v48
  %v169 = vunpack.c.l.b16 %v49
  %v170 = vunpack.c.l.b16 %v50
  %v171 = vunpack.c.l.b16 %v51
  %v172 = vunpack.c.l.b16 %v52
  %v173 = vunpack.c.l.b16 %v53
  %v174 = vpack.c.b16 %v159, %v158
  %v175 = vpack.c.b16 %v161, %v160
  %v176 = vpack.c.b16 %v163, %v162
  %v177 = vpack.c.b16 %v165, %v164
  %v178 = vpack.c.b16 %v167, %v166
  %v179 = vpack.c.b16 %v169, %v168
  %v180 = vpack.c.b16 %v171, %v170
  %v181 = vpack.c.b16 %v173, %v172
  %190 = vmatpush.bf16.msra.mxu0 %v141
  %191 = vmatpush.bf16.msra.mxu0 %v140
  %192 = vmatpush.bf16.msra.mxu0 %v139
  %193 = vmatpush.bf16.msra.mxu0 %v138
  %194 = vmatpush.bf16.msra.mxu0 %v137
  %195 = vmatpush.bf16.msra.mxu0 %v136
  %196 = vmatpush.bf16.msra.mxu0 %v135
  %197 = vmatpush.bf16.msra.mxu0 %v134
  %198 = vmatmul.bf16.gmra.mxu0 %v174
  %v199 = vpop.f32.mrf.mxu0
  %v200 = vadd.f32 0.0, %v199
  %v201 = vpop.f32.mrf.mxu0
  %v202 = vadd.f32 0.0, %v201
  %203 = vmatmul.bf16.gmra.mxu0 %v175
  %v204 = vpop.f32.mrf.mxu0
  %v205 = vadd.f32 0.0, %v204
  %v206 = vpop.f32.mrf.mxu0
  %v207 = vadd.f32 0.0, %v206
  %208 = vmatmul.bf16.gmra.mxu0 %v176
  %v209 = vpop.f32.mrf.mxu0
  %v210 = vadd.f32 0.0, %v209
  %v211 = vpop.f32.mrf.mxu0
  %v212 = vadd.f32 0.0, %v211
  %213 = vmatmul.bf16.gmra.mxu0 %v177
  %v214 = vpop.f32.mrf.mxu0
  %v215 = vadd.f32 0.0, %v214
  %v216 = vpop.f32.mrf.mxu0
  %v217 = vadd.f32 0.0, %v216
  %218 = vmatmul.bf16.gmra.mxu0 %v178
  %v219 = vpop.f32.mrf.mxu0
  %v220 = vadd.f32 0.0, %v219
  %v221 = vpop.f32.mrf.mxu0
  %v222 = vadd.f32 0.0, %v221
  %223 = vmatmul.bf16.gmra.mxu0 %v179
  %v224 = vpop.f32.mrf.mxu0
  %v225 = vadd.f32 0.0, %v224
  %v226 = vpop.f32.mrf.mxu0
  %v227 = vadd.f32 0.0, %v226
  %228 = vmatmul.bf16.gmra.mxu0 %v180
  %v229 = vpop.f32.mrf.mxu0
  %v230 = vadd.f32 0.0, %v229
  %v231 = vpop.f32.mrf.mxu0
  %v232 = vadd.f32 0.0, %v231
  %233 = vmatmul.bf16.gmra.mxu0 %v181
  %v234 = vpop.f32.mrf.mxu0
  %v235 = vadd.f32 0.0, %v234
  %v236 = vpop.f32.mrf.mxu0
  %v237 = vadd.f32 0.0, %v236
  %238 = vdwg.mxu0
  %v239 = vmul.f32 %v200, %v86
  %v240 = vmul.f32 %v202, %v87
  %v241 = vmul.f32 %v205, %v88
  %v242 = vmul.f32 %v207, %v89
  %v243 = vmul.f32 %v210, %v90
  %v244 = vmul.f32 %v212, %v91
  %v245 = vmul.f32 %v215, %v92
  %v246 = vmul.f32 %v217, %v93
  %v247 = vmul.f32 %v220, %v94
  %v248 = vmul.f32 %v222, %v95
  %v249 = vmul.f32 %v225, %v96
  %v250 = vmul.f32 %v227, %v97
  %v251 = vmul.f32 %v230, %v98
  %v252 = vmul.f32 %v232, %v99
  %v253 = vmul.f32 %v235, %v100
  %v254 = vmul.f32 %v237, %v101
  %v255 = vld [vmem:[%s5] sm:$0xff]
  %v256 = vld [vmem:[%s5 + $0x8] sm:$0xff]
  %v257 = vld [vmem:[%s5 + $0x10] sm:$0xff]
  %v258 = vld [vmem:[%s5 + $0x18] sm:$0xff]
  %v259 = vld [vmem:[%s6] sm:$0x1]
  %v261 = vperm.slane %v259, 0
  %vm263 = vcmask 261120
  %v265 = vsel %vm263, %v239, 0
  %v268 = vsel %vm263, %v240, 0
  %v271 = vsel %vm263, %v241, 0
  %v274 = vsel %vm263, %v242, 0
  %v277 = vsel %vm263, %v243, 0
  %v280 = vsel %vm263, %v244, 0
  %v283 = vsel %vm263, %v245, 0
  %v286 = vsel %vm263, %v246, 0
  %v289 = vsel %vm263, %v247, 0
  %v292 = vsel %vm263, %v248, 0
  %v295 = vsel %vm263, %v249, 0
  %v298 = vsel %vm263, %v250, 0
  %v301 = vsel %vm263, %v251, 0
  %v304 = vsel %vm263, %v252, 0
  %v307 = vsel %vm263, %v253, 0
  %v310 = vsel %vm263, %v254, 0
  %312 = vmatpush.msra.mxu0 0.0
  %313 = vmatpush.msra.mxu0 0.0
  %314 = vmatpush.msra.mxu0 0.0
  %315 = vmatpush.msra.mxu0 0.0
  %316 = vmatpush.msra.mxu0 0.0
  %317 = vmatpush.msra.mxu0 0.0
  %318 = vmatpush.msra.mxu0 0.0
  %319 = vmatpush.msra.mxu0 0.0
  %320 = vmatpush.msra.mxu0 0.0
  %321 = vmatpush.msra.mxu0 0.0
  %322 = vmatpush.msra.mxu0 0.0
  %323 = vmatpush.msra.mxu0 0.0
  %324 = vmatpush.msra.mxu0 %v258
  %325 = vmatpush.msra.mxu0 %v257
  %326 = vmatpush.msra.mxu0 %v256
  %327 = vmatpush.msra.mxu0 %v255
  %328 = vmatmul.f32.gmra.mxu0 %v265
  %v329 = vpop.f32.mrf.mxu0
  %v330 = vadd.f32 %v261, %v329
  %331 = vmatmul.f32.gmra.mxu0 %v268
  %v332 = vpop.f32.mrf.mxu0
  %v333 = vadd.f32 %v261, %v332
  %334 = vmatmul.f32.gmra.mxu0 %v271
  %v335 = vpop.f32.mrf.mxu0
  %v336 = vadd.f32 %v261, %v335
  %337 = vmatmul.f32.gmra.mxu0 %v274
  %v338 = vpop.f32.mrf.mxu0
  %v339 = vadd.f32 %v261, %v338
  %340 = vmatmul.f32.gmra.mxu0 %v277
  %v341 = vpop.f32.mrf.mxu0
  %v342 = vadd.f32 %v261, %v341
  %343 = vmatmul.f32.gmra.mxu0 %v280
  %v344 = vpop.f32.mrf.mxu0
  %v345 = vadd.f32 %v261, %v344
  %346 = vmatmul.f32.gmra.mxu0 %v283
  %v347 = vpop.f32.mrf.mxu0
  %v348 = vadd.f32 %v261, %v347
  %349 = vmatmul.f32.gmra.mxu0 %v286
  %v350 = vpop.f32.mrf.mxu0
  %v351 = vadd.f32 %v261, %v350
  %352 = vmatmul.f32.gmra.mxu0 %v289
  %v353 = vpop.f32.mrf.mxu0
  %v354 = vadd.f32 %v261, %v353
  %355 = vmatmul.f32.gmra.mxu0 %v292
  %v356 = vpop.f32.mrf.mxu0
  %v357 = vadd.f32 %v261, %v356
  %358 = vmatmul.f32.gmra.mxu0 %v295
  %v359 = vpop.f32.mrf.mxu0
  %v360 = vadd.f32 %v261, %v359
  %361 = vmatmul.f32.gmra.mxu0 %v298
  %v362 = vpop.f32.mrf.mxu0
  %v363 = vadd.f32 %v261, %v362
  %364 = vmatmul.f32.gmra.mxu0 %v301
  %v365 = vpop.f32.mrf.mxu0
  %v366 = vadd.f32 %v261, %v365
  %367 = vmatmul.f32.gmra.mxu0 %v304
  %v368 = vpop.f32.mrf.mxu0
  %v369 = vadd.f32 %v261, %v368
  %370 = vmatmul.f32.gmra.mxu0 %v307
  %v371 = vpop.f32.mrf.mxu0
  %v372 = vadd.f32 %v261, %v371
  %373 = vmatmul.f32.gmra.mxu0 %v310
  %v374 = vpop.f32.mrf.mxu0
  %v375 = vadd.f32 %v261, %v374
  %376 = vdwg.mxu0
  %v377 = vmax.f32 %v330, 0.0
  %v378 = vmax.f32 %v333, 0.0
  %v379 = vmax.f32 %v336, 0.0
  %v380 = vmax.f32 %v339, 0.0
  %v381 = vmax.f32 %v342, 0.0
  %v382 = vmax.f32 %v345, 0.0
  %v383 = vmax.f32 %v348, 0.0
  %v384 = vmax.f32 %v351, 0.0
  %v385 = vmax.f32 %v354, 0.0
  %v386 = vmax.f32 %v357, 0.0
  %v387 = vmax.f32 %v360, 0.0
  %v388 = vmax.f32 %v363, 0.0
  %v389 = vmax.f32 %v366, 0.0
  %v390 = vmax.f32 %v369, 0.0
  %v391 = vmax.f32 %v372, 0.0
  %v392 = vmax.f32 %v375, 0.0
  %v393 = vmul.f32 %v70, %v377
  %v394 = vmul.f32 %v71, %v378
  %v395 = vmul.f32 %v72, %v379
  %v396 = vmul.f32 %v73, %v380
  %v397 = vmul.f32 %v74, %v381
  %v398 = vmul.f32 %v75, %v382
  %v399 = vmul.f32 %v76, %v383
  %v400 = vmul.f32 %v77, %v384
  %v401 = vmul.f32 %v78, %v385
  %v402 = vmul.f32 %v79, %v386
  %v403 = vmul.f32 %v80, %v387
  %v404 = vmul.f32 %v81, %v388
  %v405 = vmul.f32 %v82, %v389
  %v406 = vmul.f32 %v83, %v390
  %v407 = vmul.f32 %v84, %v391
  %v408 = vmul.f32 %v85, %v392
  %v409 = vpack.c.bf16 %v394, %v393
  %v410 = vpack.c.bf16 %v396, %v395
  %v411 = vpack.c.bf16 %v398, %v397
  %v412 = vpack.c.bf16 %v400, %v399
  %v413 = vpack.c.bf16 %v402, %v401
  %v414 = vpack.c.bf16 %v404, %v403
  %v415 = vpack.c.bf16 %v406, %v405
  %v416 = vpack.c.bf16 %v408, %v407
  %417 = vmatpush.bf16.msra.mxu0 %v416
  %418 = vmatpush.bf16.msra.mxu0 %v415
  %419 = vmatpush.bf16.msra.mxu0 %v414
  %420 = vmatpush.bf16.msra.mxu0 %v413
  %421 = vmatpush.bf16.msra.mxu0 %v412
  %422 = vmatpush.bf16.msra.mxu0 %v411
  %423 = vmatpush.bf16.msra.mxu0 %v410
  %424 = vmatpush.bf16.msra.mxu0 %v409
  %425 = vmatmul.bf16.gmra.mxu0 %v174
  %v426 = vpop.f32.mrf.mxu0
  %v427 = vadd.f32 0.0, %v426
  %v428 = vpop.f32.mrf.mxu0
  %v429 = vadd.f32 0.0, %v428
  %430 = vmatmul.bf16.gmra.mxu0 %v175
  %v431 = vpop.f32.mrf.mxu0
  %v432 = vadd.f32 0.0, %v431
  %v433 = vpop.f32.mrf.mxu0
  %v434 = vadd.f32 0.0, %v433
  %435 = vmatmul.bf16.gmra.mxu0 %v176
  %v436 = vpop.f32.mrf.mxu0
  %v437 = vadd.f32 0.0, %v436
  %v438 = vpop.f32.mrf.mxu0
  %v439 = vadd.f32 0.0, %v438
  %440 = vmatmul.bf16.gmra.mxu0 %v177
  %v441 = vpop.f32.mrf.mxu0
  %v442 = vadd.f32 0.0, %v441
  %v443 = vpop.f32.mrf.mxu0
  %v444 = vadd.f32 0.0, %v443
  %445 = vmatmul.bf16.gmra.mxu0 %v178
  %v446 = vpop.f32.mrf.mxu0
  %v447 = vadd.f32 0.0, %v446
  %v448 = vpop.f32.mrf.mxu0
  %v449 = vadd.f32 0.0, %v448
  %450 = vmatmul.bf16.gmra.mxu0 %v179
  %v451 = vpop.f32.mrf.mxu0
  %v452 = vadd.f32 0.0, %v451
  %v453 = vpop.f32.mrf.mxu0
  %v454 = vadd.f32 0.0, %v453
  %455 = vmatmul.bf16.gmra.mxu0 %v180
  %v456 = vpop.f32.mrf.mxu0
  %v457 = vadd.f32 0.0, %v456
  %v458 = vpop.f32.mrf.mxu0
  %v459 = vadd.f32 0.0, %v458
  %460 = vmatmul.bf16.gmra.mxu0 %v181
  %v461 = vpop.f32.mrf.mxu0
  %v462 = vadd.f32 0.0, %v461
  %v463 = vpop.f32.mrf.mxu0
  %v464 = vadd.f32 0.0, %v463
  %465 = vdwg.mxu0
  %v466 = vmul.f32 %v427, %v86
  %v467 = vmul.f32 %v429, %v87
  %v468 = vmul.f32 %v432, %v88
  %v469 = vmul.f32 %v434, %v89
  %v470 = vmul.f32 %v437, %v90
  %v471 = vmul.f32 %v439, %v91
  %v472 = vmul.f32 %v442, %v92
  %v473 = vmul.f32 %v444, %v93
  %v474 = vmul.f32 %v447, %v94
  %v475 = vmul.f32 %v449, %v95
  %v476 = vmul.f32 %v452, %v96
  %v477 = vmul.f32 %v454, %v97
  %v478 = vmul.f32 %v457, %v98
  %v479 = vmul.f32 %v459, %v99
  %v480 = vmul.f32 %v462, %v100
  %v481 = vmul.f32 %v464, %v101
  %v482 = vld [vmem:[%s7] sm:$0xff]
  %v483 = vld [vmem:[%s7 + $0x8] sm:$0xff]
  %v484 = vld [vmem:[%s7 + $0x10] sm:$0xff]
  %v485 = vld [vmem:[%s7 + $0x18] sm:$0xff]
  %v486 = vld [vmem:[%s8] sm:$0x1]
  %v488 = vperm.slane %v486, 0
  %v491 = vsel %vm263, %v466, 0
  %v494 = vsel %vm263, %v467, 0
  %v497 = vsel %vm263, %v468, 0
  %v500 = vsel %vm263, %v469, 0
  %v503 = vsel %vm263, %v470, 0
  %v506 = vsel %vm263, %v471, 0
  %v509 = vsel %vm263, %v472, 0
  %v512 = vsel %vm263, %v473, 0
  %v515 = vsel %vm263, %v474, 0
  %v518 = vsel %vm263, %v475, 0
  %v521 = vsel %vm263, %v476, 0
  %v524 = vsel %vm263, %v477, 0
  %v527 = vsel %vm263, %v478, 0
  %v530 = vsel %vm263, %v479, 0
  %v533 = vsel %vm263, %v480, 0
  %v536 = vsel %vm263, %v481, 0
  %538 = vmatpush.msra.mxu0 0.0
  %539 = vmatpush.msra.mxu0 0.0
  %540 = vmatpush.msra.mxu0 0.0
  %541 = vmatpush.msra.mxu0 0.0
  %542 = vmatpush.msra.mxu0 0.0
  %543 = vmatpush.msra.mxu0 0.0
  %544 = vmatpush.msra.mxu0 0.0
  %545 = vmatpush.msra.mxu0 0.0
  %546 = vmatpush.msra.mxu0 0.0
  %547 = vmatpush.msra.mxu0 0.0
  %548 = vmatpush.msra.mxu0 0.0
  %549 = vmatpush.msra.mxu0 0.0
  %550 = vmatpush.msra.mxu0 %v485
  %551 = vmatpush.msra.mxu0 %v484
  %552 = vmatpush.msra.mxu0 %v483
  %553 = vmatpush.msra.mxu0 %v482
  %554 = vmatmul.f32.gmra.mxu0 %v491
  %v555 = vpop.f32.mrf.mxu0
  %v556 = vadd.f32 %v488, %v555
  %557 = vmatmul.f32.gmra.mxu0 %v494
  %v558 = vpop.f32.mrf.mxu0
  %v559 = vadd.f32 %v488, %v558
  %560 = vmatmul.f32.gmra.mxu0 %v497
  %v561 = vpop.f32.mrf.mxu0
  %v562 = vadd.f32 %v488, %v561
  %563 = vmatmul.f32.gmra.mxu0 %v500
  %v564 = vpop.f32.mrf.mxu0
  %v565 = vadd.f32 %v488, %v564
  %566 = vmatmul.f32.gmra.mxu0 %v503
  %v567 = vpop.f32.mrf.mxu0
  %v568 = vadd.f32 %v488, %v567
  %569 = vmatmul.f32.gmra.mxu0 %v506
  %v570 = vpop.f32.mrf.mxu0
  %v571 = vadd.f32 %v488, %v570
  %572 = vmatmul.f32.gmra.mxu0 %v509
  %v573 = vpop.f32.mrf.mxu0
  %v574 = vadd.f32 %v488, %v573
  %575 = vmatmul.f32.gmra.mxu0 %v512
  %v576 = vpop.f32.mrf.mxu0
  %v577 = vadd.f32 %v488, %v576
  %578 = vmatmul.f32.gmra.mxu0 %v515
  %v579 = vpop.f32.mrf.mxu0
  %v580 = vadd.f32 %v488, %v579
  %581 = vmatmul.f32.gmra.mxu0 %v518
  %v582 = vpop.f32.mrf.mxu0
  %v583 = vadd.f32 %v488, %v582
  %584 = vmatmul.f32.gmra.mxu0 %v521
  %v585 = vpop.f32.mrf.mxu0
  %v586 = vadd.f32 %v488, %v585
  %587 = vmatmul.f32.gmra.mxu0 %v524
  %v588 = vpop.f32.mrf.mxu0
  %v589 = vadd.f32 %v488, %v588
  %590 = vmatmul.f32.gmra.mxu0 %v527
  %v591 = vpop.f32.mrf.mxu0
  %v592 = vadd.f32 %v488, %v591
  %593 = vmatmul.f32.gmra.mxu0 %v530
  %v594 = vpop.f32.mrf.mxu0
  %v595 = vadd.f32 %v488, %v594
  %596 = vmatmul.f32.gmra.mxu0 %v533
  %v597 = vpop.f32.mrf.mxu0
  %v598 = vadd.f32 %v488, %v597
  %599 = vmatmul.f32.gmra.mxu0 %v536
  %v600 = vpop.f32.mrf.mxu0
  %v601 = vadd.f32 %v488, %v600
  %602 = vdwg.mxu0
  %v603 = vmax.f32 %v556, 0.0
  %v604 = vmax.f32 %v559, 0.0
  %v605 = vmax.f32 %v562, 0.0
  %v606 = vmax.f32 %v565, 0.0
  %v607 = vmax.f32 %v568, 0.0
  %v608 = vmax.f32 %v571, 0.0
  %v609 = vmax.f32 %v574, 0.0
  %v610 = vmax.f32 %v577, 0.0
  %v611 = vmax.f32 %v580, 0.0
  %v612 = vmax.f32 %v583, 0.0
  %v613 = vmax.f32 %v586, 0.0
  %v614 = vmax.f32 %v589, 0.0
  %v615 = vmax.f32 %v592, 0.0
  %v616 = vmax.f32 %v595, 0.0
  %v617 = vmax.f32 %v598, 0.0
  %v618 = vmax.f32 %v601, 0.0
  %v619 = vld [vmem:[%s9] sm:$0xff]
  %v620 = vld [vmem:[%s9 + $0x8] sm:$0xff]
  %vm621 = vcmask 130048
  %v623 = vsel %vm621, %v603, 0
  %v626 = vsel %vm621, %v604, 0
  %v629 = vsel %vm621, %v605, 0
  %v632 = vsel %vm621, %v606, 0
  %v635 = vsel %vm621, %v607, 0
  %v638 = vsel %vm621, %v608, 0
  %v641 = vsel %vm621, %v609, 0
  %v644 = vsel %vm621, %v610, 0
  %v647 = vsel %vm621, %v611, 0
  %v650 = vsel %vm621, %v612, 0
  %v653 = vsel %vm621, %v613, 0
  %v656 = vsel %vm621, %v614, 0
  %v659 = vsel %vm621, %v615, 0
  %v662 = vsel %vm621, %v616, 0
  %v665 = vsel %vm621, %v617, 0
  %v668 = vsel %vm621, %v618, 0
  %670 = vmatpush.msra.mxu0 0.0
  %671 = vmatpush.msra.mxu0 0.0
  %672 = vmatpush.msra.mxu0 0.0
  %673 = vmatpush.msra.mxu0 0.0
  %674 = vmatpush.msra.mxu0 0.0
  %675 = vmatpush.msra.mxu0 0.0
  %676 = vmatpush.msra.mxu0 0.0
  %677 = vmatpush.msra.mxu0 0.0
  %678 = vmatpush.msra.mxu0 0.0
  %679 = vmatpush.msra.mxu0 0.0
  %680 = vmatpush.msra.mxu0 0.0
  %681 = vmatpush.msra.mxu0 0.0
  %682 = vmatpush.msra.mxu0 0.0
  %683 = vmatpush.msra.mxu0 0.0
  %684 = vmatpush.msra.mxu0 %v620
  %685 = vmatpush.msra.mxu0 %v619
  %686 = vmatmul.f32.gmra.mxu0 %v623
  %v687 = vpop.f32.mrf.mxu0
  %v688 = vadd.f32 0.0, %v687
  %689 = vmatmul.f32.gmra.mxu0 %v626
  %v690 = vpop.f32.mrf.mxu0
  %v691 = vadd.f32 0.0, %v690
  %692 = vmatmul.f32.gmra.mxu0 %v629
  %v693 = vpop.f32.mrf.mxu0
  %v694 = vadd.f32 0.0, %v693
  %695 = vmatmul.f32.gmra.mxu0 %v632
  %v696 = vpop.f32.mrf.mxu0
  %v697 = vadd.f32 0.0, %v696
  %698 = vmatmul.f32.gmra.mxu0 %v635
  %v699 = vpop.f32.mrf.mxu0
  %v700 = vadd.f32 0.0, %v699
  %701 = vmatmul.f32.gmra.mxu0 %v638
  %v702 = vpop.f32.mrf.mxu0
  %v703 = vadd.f32 0.0, %v702
  %704 = vmatmul.f32.gmra.mxu0 %v641
  %v705 = vpop.f32.mrf.mxu0
  %v706 = vadd.f32 0.0, %v705
  %707 = vmatmul.f32.gmra.mxu0 %v644
  %v708 = vpop.f32.mrf.mxu0
  %v709 = vadd.f32 0.0, %v708
  %710 = vmatmul.f32.gmra.mxu0 %v647
  %v711 = vpop.f32.mrf.mxu0
  %v712 = vadd.f32 0.0, %v711
  %713 = vmatmul.f32.gmra.mxu0 %v650
  %v714 = vpop.f32.mrf.mxu0
  %v715 = vadd.f32 0.0, %v714
  %716 = vmatmul.f32.gmra.mxu0 %v653
  %v717 = vpop.f32.mrf.mxu0
  %v718 = vadd.f32 0.0, %v717
  %719 = vmatmul.f32.gmra.mxu0 %v656
  %v720 = vpop.f32.mrf.mxu0
  %v721 = vadd.f32 0.0, %v720
  %722 = vmatmul.f32.gmra.mxu0 %v659
  %v723 = vpop.f32.mrf.mxu0
  %v724 = vadd.f32 0.0, %v723
  %725 = vmatmul.f32.gmra.mxu0 %v662
  %v726 = vpop.f32.mrf.mxu0
  %v727 = vadd.f32 0.0, %v726
  %728 = vmatmul.f32.gmra.mxu0 %v665
  %v729 = vpop.f32.mrf.mxu0
  %v730 = vadd.f32 0.0, %v729
  %731 = vmatmul.f32.gmra.mxu0 %v668
  %v732 = vpop.f32.mrf.mxu0
  %v733 = vadd.f32 0.0, %v732
  %734 = vdwg.mxu0
  %v735 = vpack.c.bf16 %v691, %v688
  %v736 = vpack.c.bf16 %v697, %v694
  %v737 = vpack.c.bf16 %v703, %v700
  %v738 = vpack.c.bf16 %v709, %v706
  %v739 = vpack.c.bf16 %v715, %v712
  %v740 = vpack.c.bf16 %v721, %v718
  %v741 = vpack.c.bf16 %v727, %v724
  %v742 = vpack.c.bf16 %v733, %v730
  %v743 = vld [vmem:[%s10] sm:$0x1]
  %v745 = vperm.slane %v743, 0
  %v763 = vunpack.c.l.b16 %v54
  %v764 = vunpack.c.l.b16 %v55
  %v765 = vunpack.c.l.b16 %v56
  %v766 = vunpack.c.l.b16 %v57
  %v767 = vunpack.c.l.b16 %v58
  %v768 = vunpack.c.l.b16 %v59
  %v769 = vunpack.c.l.b16 %v60
  %v770 = vunpack.c.l.b16 %v61
  %v771 = vunpack.c.l.b16 %v62
  %v772 = vunpack.c.l.b16 %v63
  %v773 = vunpack.c.l.b16 %v64
  %v774 = vunpack.c.l.b16 %v65
  %v775 = vunpack.c.l.b16 %v66
  %v776 = vunpack.c.l.b16 %v67
  %v777 = vunpack.c.l.b16 %v68
  %v778 = vunpack.c.l.b16 %v69
  %v779 = vpack.c.b16 %v764, %v763
  %v780 = vpack.c.b16 %v766, %v765
  %v781 = vpack.c.b16 %v768, %v767
  %v782 = vpack.c.b16 %v770, %v769
  %v783 = vpack.c.b16 %v772, %v771
  %v784 = vpack.c.b16 %v774, %v773
  %v785 = vpack.c.b16 %v776, %v775
  %v786 = vpack.c.b16 %v778, %v777
  %795 = vmatpush.bf16.msra.mxu0 %v742
  %796 = vmatpush.bf16.msra.mxu0 %v741
  %797 = vmatpush.bf16.msra.mxu0 %v740
  %798 = vmatpush.bf16.msra.mxu0 %v739
  %799 = vmatpush.bf16.msra.mxu0 %v738
  %800 = vmatpush.bf16.msra.mxu0 %v737
  %801 = vmatpush.bf16.msra.mxu0 %v736
  %802 = vmatpush.bf16.msra.mxu0 %v735
  %803 = vmatmul.bf16.gmra.mxu0 %v779
  %v804 = vpop.f32.mrf.mxu0
  %v805 = vadd.f32 %v745, %v804
  %v806 = vpop.f32.mrf.mxu0
  %v807 = vadd.f32 %v745, %v806
  %808 = vmatmul.bf16.gmra.mxu0 %v780
  %v809 = vpop.f32.mrf.mxu0
  %v810 = vadd.f32 %v745, %v809
  %v811 = vpop.f32.mrf.mxu0
  %v812 = vadd.f32 %v745, %v811
  %813 = vmatmul.bf16.gmra.mxu0 %v781
  %v814 = vpop.f32.mrf.mxu0
  %v815 = vadd.f32 %v745, %v814
  %v816 = vpop.f32.mrf.mxu0
  %v817 = vadd.f32 %v745, %v816
  %818 = vmatmul.bf16.gmra.mxu0 %v782
  %v819 = vpop.f32.mrf.mxu0
  %v820 = vadd.f32 %v745, %v819
  %v821 = vpop.f32.mrf.mxu0
  %v822 = vadd.f32 %v745, %v821
  %823 = vmatmul.bf16.gmra.mxu0 %v783
  %v824 = vpop.f32.mrf.mxu0
  %v825 = vadd.f32 %v745, %v824
  %v826 = vpop.f32.mrf.mxu0
  %v827 = vadd.f32 %v745, %v826
  %828 = vmatmul.bf16.gmra.mxu0 %v784
  %v829 = vpop.f32.mrf.mxu0
  %v830 = vadd.f32 %v745, %v829
  %v831 = vpop.f32.mrf.mxu0
  %v832 = vadd.f32 %v745, %v831
  %833 = vmatmul.bf16.gmra.mxu0 %v785
  %v834 = vpop.f32.mrf.mxu0
  %v835 = vadd.f32 %v745, %v834
  %v836 = vpop.f32.mrf.mxu0
  %v837 = vadd.f32 %v745, %v836
  %838 = vmatmul.bf16.gmra.mxu0 %v786
  %v839 = vpop.f32.mrf.mxu0
  %v840 = vadd.f32 %v745, %v839
  %v841 = vpop.f32.mrf.mxu0
  %v842 = vadd.f32 %v745, %v841
  %843 = vdwg.mxu0
  %vm844 = vcmask 64512
  %v845 = vsel %vm844, %v805, -inf
  %846 = vmax.xlane.f32.xlu0 %v845
  %v847 = vpop.xlane.xlu0 %846
  %v848 = vsel %vm844, %v807, -inf
  %849 = vmax.xlane.f32.xlu0 %v848
  %v850 = vpop.xlane.xlu0 %849
  %v851 = vsel %vm844, %v810, -inf
  %852 = vmax.xlane.f32.xlu0 %v851
  %v853 = vpop.xlane.xlu0 %852
  %v854 = vsel %vm844, %v812, -inf
  %855 = vmax.xlane.f32.xlu0 %v854
  %v856 = vpop.xlane.xlu0 %855
  %v857 = vsel %vm844, %v815, -inf
  %858 = vmax.xlane.f32.xlu0 %v857
  %v859 = vpop.xlane.xlu0 %858
  %v860 = vsel %vm844, %v817, -inf
  %861 = vmax.xlane.f32.xlu0 %v860
  %v862 = vpop.xlane.xlu0 %861
  %v863 = vsel %vm844, %v820, -inf
  %864 = vmax.xlane.f32.xlu0 %v863
  %v865 = vpop.xlane.xlu0 %864
  %v866 = vsel %vm844, %v822, -inf
  %867 = vmax.xlane.f32.xlu0 %v866
  %v868 = vpop.xlane.xlu0 %867
  %v869 = vsel %vm844, %v825, -inf
  %870 = vmax.xlane.f32.xlu0 %v869
  %v871 = vpop.xlane.xlu0 %870
  %v872 = vsel %vm844, %v827, -inf
  %873 = vmax.xlane.f32.xlu0 %v872
  %v874 = vpop.xlane.xlu0 %873
  %v875 = vsel %vm844, %v830, -inf
  %876 = vmax.xlane.f32.xlu0 %v875
  %v877 = vpop.xlane.xlu0 %876
  %v878 = vsel %vm844, %v832, -inf
  %879 = vmax.xlane.f32.xlu0 %v878
  %v880 = vpop.xlane.xlu0 %879
  %v881 = vsel %vm844, %v835, -inf
  %882 = vmax.xlane.f32.xlu0 %v881
  %v883 = vpop.xlane.xlu0 %882
  %v884 = vsel %vm844, %v837, -inf
  %885 = vmax.xlane.f32.xlu0 %v884
  %v886 = vpop.xlane.xlu0 %885
  %v887 = vsel %vm844, %v840, -inf
  %888 = vmax.xlane.f32.xlu0 %v887
  %v889 = vpop.xlane.xlu0 %888
  %v890 = vsel %vm844, %v842, -inf
  %891 = vmax.xlane.f32.xlu0 %v890
  %v892 = vpop.xlane.xlu0 %891
  %v893 = vsub.f32 %v805, %v847
  %v894 = vsub.f32 %v807, %v850
  %v895 = vsub.f32 %v810, %v853
  %v896 = vsub.f32 %v812, %v856
  %v897 = vsub.f32 %v815, %v859
  %v898 = vsub.f32 %v817, %v862
  %v899 = vsub.f32 %v820, %v865
  %v900 = vsub.f32 %v822, %v868
  %v901 = vsub.f32 %v825, %v871
  %v902 = vsub.f32 %v827, %v874
  %v903 = vsub.f32 %v830, %v877
  %v904 = vsub.f32 %v832, %v880
  %v905 = vsub.f32 %v835, %v883
  %v906 = vsub.f32 %v837, %v886
  %v907 = vsub.f32 %v840, %v889
  %v908 = vsub.f32 %v842, %v892
  %v909 = vmul.f32 %v893, 1.442695
  %v910 = vpow.pop %v909
  %v911 = vmul.f32 %v894, 1.442695
  %v912 = vpow.pop %v911
  %v913 = vmul.f32 %v895, 1.442695
  %v914 = vpow.pop %v913
  %v915 = vmul.f32 %v896, 1.442695
  %v916 = vpow.pop %v915
  %v917 = vmul.f32 %v897, 1.442695
  %v918 = vpow.pop %v917
  %v919 = vmul.f32 %v898, 1.442695
  %v920 = vpow.pop %v919
  %v921 = vmul.f32 %v899, 1.442695
  %v922 = vpow.pop %v921
  %v923 = vmul.f32 %v900, 1.442695
  %v924 = vpow.pop %v923
  %v925 = vmul.f32 %v901, 1.442695
  %v926 = vpow.pop %v925
  %v927 = vmul.f32 %v902, 1.442695
  %v928 = vpow.pop %v927
  %v929 = vmul.f32 %v903, 1.442695
  %v930 = vpow.pop %v929
  %v931 = vmul.f32 %v904, 1.442695
  %v932 = vpow.pop %v931
  %v933 = vmul.f32 %v905, 1.442695
  %v934 = vpow.pop %v933
  %v935 = vmul.f32 %v906, 1.442695
  %v936 = vpow.pop %v935
  %v937 = vmul.f32 %v907, 1.442695
  %v938 = vpow.pop %v937
  %v939 = vmul.f32 %v908, 1.442695
  %v940 = vpow.pop %v939
  %v941 = vsel %vm844, %v910, 0.0
  %942 = vadd.xlane.f32.xlu0 %v941
  %v943 = vpop.xlane.xlu0 %942
  %v944 = vsel %vm844, %v912, 0.0
  %945 = vadd.xlane.f32.xlu0 %v944
  %v946 = vpop.xlane.xlu0 %945
  %v947 = vsel %vm844, %v914, 0.0
  %948 = vadd.xlane.f32.xlu0 %v947
  %v949 = vpop.xlane.xlu0 %948
  %v950 = vsel %vm844, %v916, 0.0
  %951 = vadd.xlane.f32.xlu0 %v950
  %v952 = vpop.xlane.xlu0 %951
  %v953 = vsel %vm844, %v918, 0.0
  %954 = vadd.xlane.f32.xlu0 %v953
  %v955 = vpop.xlane.xlu0 %954
  %v956 = vsel %vm844, %v920, 0.0
  %957 = vadd.xlane.f32.xlu0 %v956
  %v958 = vpop.xlane.xlu0 %957
  %v959 = vsel %vm844, %v922, 0.0
  %960 = vadd.xlane.f32.xlu0 %v959
  %v961 = vpop.xlane.xlu0 %960
  %v962 = vsel %vm844, %v924, 0.0
  %963 = vadd.xlane.f32.xlu0 %v962
  %v964 = vpop.xlane.xlu0 %963
  %v965 = vsel %vm844, %v926, 0.0
  %966 = vadd.xlane.f32.xlu0 %v965
  %v967 = vpop.xlane.xlu0 %966
  %v968 = vsel %vm844, %v928, 0.0
  %969 = vadd.xlane.f32.xlu0 %v968
  %v970 = vpop.xlane.xlu0 %969
  %v971 = vsel %vm844, %v930, 0.0
  %972 = vadd.xlane.f32.xlu0 %v971
  %v973 = vpop.xlane.xlu0 %972
  %v974 = vsel %vm844, %v932, 0.0
  %975 = vadd.xlane.f32.xlu0 %v974
  %v976 = vpop.xlane.xlu0 %975
  %v977 = vsel %vm844, %v934, 0.0
  %978 = vadd.xlane.f32.xlu0 %v977
  %v979 = vpop.xlane.xlu0 %978
  %v980 = vsel %vm844, %v936, 0.0
  %981 = vadd.xlane.f32.xlu0 %v980
  %v982 = vpop.xlane.xlu0 %981
  %v983 = vsel %vm844, %v938, 0.0
  %984 = vadd.xlane.f32.xlu0 %v983
  %v985 = vpop.xlane.xlu0 %984
  %v986 = vsel %vm844, %v940, 0.0
  %987 = vadd.xlane.f32.xlu0 %v986
  %v988 = vpop.xlane.xlu0 %987
  %v989 = vlog2.pop %v943
  %v990 = vmul.f32 %v989, 0.6931472
  %v991 = vlog2.pop %v946
  %v992 = vmul.f32 %v991, 0.6931472
  %v993 = vlog2.pop %v949
  %v994 = vmul.f32 %v993, 0.6931472
  %v995 = vlog2.pop %v952
  %v996 = vmul.f32 %v995, 0.6931472
  %v997 = vlog2.pop %v955
  %v998 = vmul.f32 %v997, 0.6931472
  %v999 = vlog2.pop %v958
  %v1000 = vmul.f32 %v999, 0.6931472
  %v1001 = vlog2.pop %v961
  %v1002 = vmul.f32 %v1001, 0.6931472
  %v1003 = vlog2.pop %v964
  %v1004 = vmul.f32 %v1003, 0.6931472
  %v1005 = vlog2.pop %v967
  %v1006 = vmul.f32 %v1005, 0.6931472
  %v1007 = vlog2.pop %v970
  %v1008 = vmul.f32 %v1007, 0.6931472
  %v1009 = vlog2.pop %v973
  %v1010 = vmul.f32 %v1009, 0.6931472
  %v1011 = vlog2.pop %v976
  %v1012 = vmul.f32 %v1011, 0.6931472
  %v1013 = vlog2.pop %v979
  %v1014 = vmul.f32 %v1013, 0.6931472
  %v1015 = vlog2.pop %v982
  %v1016 = vmul.f32 %v1015, 0.6931472
  %v1017 = vlog2.pop %v985
  %v1018 = vmul.f32 %v1017, 0.6931472
  %v1019 = vlog2.pop %v988
  %v1020 = vmul.f32 %v1019, 0.6931472
  %v1021 = vsub.f32 %v893, %v990
  %v1022 = vsub.f32 %v894, %v992
  %v1023 = vsub.f32 %v895, %v994
  %v1024 = vsub.f32 %v896, %v996
  %v1025 = vsub.f32 %v897, %v998
  %v1026 = vsub.f32 %v898, %v1000
  %v1027 = vsub.f32 %v899, %v1002
  %v1028 = vsub.f32 %v900, %v1004
  %v1029 = vsub.f32 %v901, %v1006
  %v1030 = vsub.f32 %v902, %v1008
  %v1031 = vsub.f32 %v903, %v1010
  %v1032 = vsub.f32 %v904, %v1012
  %v1033 = vsub.f32 %v905, %v1014
  %v1034 = vsub.f32 %v906, %v1016
  %v1035 = vsub.f32 %v907, %v1018
  %v1036 = vsub.f32 %v908, %v1020
  %1037 = vst.msk [vmem:[%s11] sm:$0xff] %vm844, %v1021
  %1038 = vst.msk [vmem:[%s11 + $0x8] sm:$0xff] %vm844, %v1022
  %1039 = vst.msk [vmem:[%s11 + $0x10] sm:$0xff] %vm844, %v1023
  %1040 = vst.msk [vmem:[%s11 + $0x18] sm:$0xff] %vm844, %v1024
  %1041 = vst.msk [vmem:[%s11 + $0x20] sm:$0xff] %vm844, %v1025
  %1042 = vst.msk [vmem:[%s11 + $0x28] sm:$0xff] %vm844, %v1026
  %1043 = vst.msk [vmem:[%s11 + $0x30] sm:$0xff] %vm844, %v1027
  %1044 = vst.msk [vmem:[%s11 + $0x38] sm:$0xff] %vm844, %v1028
  %1045 = vst.msk [vmem:[%s11 + $0x40] sm:$0xff] %vm844, %v1029
  %1046 = vst.msk [vmem:[%s11 + $0x48] sm:$0xff] %vm844, %v1030
  %1047 = vst.msk [vmem:[%s11 + $0x50] sm:$0xff] %vm844, %v1031
  %1048 = vst.msk [vmem:[%s11 + $0x58] sm:$0xff] %vm844, %v1032
  %1049 = vst.msk [vmem:[%s11 + $0x60] sm:$0xff] %vm844, %v1033
  %1050 = vst.msk [vmem:[%s11 + $0x68] sm:$0xff] %vm844, %v1034
  %1051 = vst.msk [vmem:[%s11 + $0x70] sm:$0xff] %vm844, %v1035
  %1052 = vst.msk [vmem:[%s11 + $0x78] sm:$0xff] %vm844, %v1036
  // Predicated region
  $region46: #{tpu_custom_call.1} parent=0 // pred_check
    _
  $region47: #{tpu_custom_call.1} parent=0 // pred_check_branch
    %1054 = sbr.rel (0) target = $region49
  $region48: #{tpu_custom_call.1} parent=0 // pred_region
    _
  $region49: #{tpu_custom_call.1} parent=0 // pred_fallthru
    _
  // Predicated region
  $region50: #{tpu_custom_call.1} parent=0 // pred_check
    _
  $region51: #{tpu_custom_call.1} parent=0 // pred_check_branch
    %1056 = sbr.rel (0) target = $region53
  $region52: #{tpu_custom_call.1} parent=0 // pred_region
    _
  $region53: #{tpu_custom_call.1} parent=0 // pred_fallthru
    _

</llo_original>
